<compile_context>
chip_gen: v5e
topology: v5e:2x2
jax: 0.10.0
libtpu: 0.0.40
codegen_flags: <defaults>
</compile_context>

<pallas_src>
import jax
import jax.numpy as jnp
from jax.experimental import pallas as pl
from jax.experimental.pallas import tpu as pltpu


def _round_up(x: int, m: int) -> int:
    return ((x + m - 1) // m) * m


def _output_layer_kernel(x_ref, w_ref, b_ref, o_ref):
    # x_ref: (block_b, D)  CLS-token rows (seq dim squeezed/pre-gathered)
    # w_ref: (D, block_c)  lane-dense weight tile (VMEM-resident per C tile)
    # b_ref: (1, block_c)  bias tile, f32
    # o_ref: (block_b, block_c)
    y = jnp.dot(x_ref[...], w_ref[...], preferred_element_type=jnp.float32)
    o_ref[...] = (y + b_ref[...]).astype(o_ref.dtype)


def output_layer(encoder_output, w, b, *, block_b=None, block_c=None,
                 matmul_dtype=None, force_pallas=True):
    """BERT head: encoder_output[:, 0] @ w + b.

    encoder_output: (B, S, D); w: (D, C) pre-transposed nn.Linear weight
    (torch stores (C, D)); b: (C,).  Returns (B, C).
    """
    B, S, D = encoder_output.shape
    Dw, C = w.shape
    assert Dw == D and b.shape == (C,)
    out_dtype = encoder_output.dtype

    # Tiny problems: a single sub-microsecond grid step is dominated by launch
    # + DMA-setup overhead; let XLA fuse slice+matmul+bias instead.
    if not force_pallas and B * D < 64 * 1024:
        return (encoder_output[:, 0] @ w + b).astype(out_dtype)

    mm_dtype = jnp.dtype(matmul_dtype) if matmul_dtype is not None else jnp.dtype(out_dtype)

    # ---- Lane-dense output: pad C up to a multiple of 128 ------------------
    C_pad = _round_up(C, 128)
    w_p = w.astype(mm_dtype)
    b_p = b.astype(jnp.float32).reshape(1, C)
    if C_pad != C:
        w_p = jnp.pad(w_p, ((0, 0), (0, C_pad - C)))
        b_p = jnp.pad(b_p, ((0, 0), (0, C_pad - C)))

    # ---- Batch / C tiling ---------------------------------------------------
    if block_b is None:
        block_b = min(_round_up(B, 8), 1024)
        # v7x has 2 TensorCores: make the "parallel" batch axis have >= 2 grid
        # steps whenever the batch is large enough to be worth splitting.
        if B >= 16 and pl.cdiv(B, block_b) < 2:
            block_b = _round_up(pl.cdiv(B, 2), 8)
    if block_c is None:
        # Lane-dense <=1024-wide weight tiles keep (D, block_c) small even
        # double-buffered (v7x has only 64 MiB physical VMEM).
        block_c = min(C_pad, 1024)
    grid = (pl.cdiv(B, block_b), pl.cdiv(C_pad, block_c))

    # ---- CLS-token gather strategy ------------------------------------------
    # Squeezed-seq BlockSpec => strided DMA of D*itemsize-byte rows (stride
    # S*D); efficient only when each row is >= ~2 KiB.  Otherwise (or when a
    # dtype cast would copy the full array anyway) pre-gather a contiguous
    # (B, D) CLS slab in the wrapper.
    row_bytes = D * mm_dtype.itemsize
    if mm_dtype != encoder_output.dtype or row_bytes < 2048:
        x_in = encoder_output[:, 0].astype(mm_dtype)
        x_spec = pl.BlockSpec((block_b, D), lambda i, j: (i, 0))
    else:
        x_in = encoder_output
        x_spec = pl.BlockSpec((block_b, None, D), lambda i, j: (i, 0, 0))

    # ---- VMEM budget / cost hint --------------------------------------------
    itm = mm_dtype.itemsize
    o_itm = jnp.dtype(out_dtype).itemsize
    vmem_need = 2 * (block_b * D * itm + D * block_c * itm
                     + block_c * 4 + block_b * block_c * o_itm)
    vmem_limit = int(min(max(2 * vmem_need, 16 * 1024 * 1024), 48 * 1024 * 1024))

    cost = pl.CostEstimate(
        flops=2 * B * D * C_pad,
        transcendentals=0,
        bytes_accessed=(B * D * itm + D * C_pad * itm + C_pad * 4
                        + B * C_pad * o_itm),
    )

    out_padded = pl.pallas_call(
        _output_layer_kernel,
        out_shape=jax.ShapeDtypeStruct((B, C_pad), out_dtype),
        grid_spec=pltpu.PrefetchScalarGridSpec(
            num_scalar_prefetch=0,
            grid=grid,
            in_specs=[
                x_spec,                                           # CLS rows
                pl.BlockSpec((D, block_c), lambda i, j: (0, j)),  # weight tile
                pl.BlockSpec((1, block_c), lambda i, j: (0, j)),  # bias tile
            ],
            out_specs=pl.BlockSpec((block_b, block_c), lambda i, j: (i, j)),
        ),
        compiler_params=pltpu.CompilerParams(
            dimension_semantics=("parallel", "parallel"),
            vmem_limit_bytes=vmem_limit,
        ),
        cost_estimate=cost,
    )(x_in, w_p, b_p)

    return out_padded[:, :C] if C_pad != C else out_padded


def _reference(encoder_output, w, b):
    return encoder_output[:, 0] @ w + b


if __name__ == "__main__":
    key = jax.random.PRNGKey(0)

    # ---- Toy config consistent with the module ------------------------------
    # batch=2, seq=8, d_model=32, num_target_categories=8.
    B, S, D, C = 2, 8, 32, 8
    k0, k1, k2, key = jax.random.split(key, 4)
    enc = jax.random.normal(k0, (B, S, D), dtype=jnp.float32)
    scale = 1.0 / (D ** 0.5)
    # nn.Linear weight is (C, D) in torch; pre-transposed here to (D, C) so the
    # kernel computes x @ W + b (same math as torch's x @ W.T + b).
    w = jax.random.uniform(k1, (D, C), jnp.float32, -scale, scale)
    b = jax.random.uniform(k2, (C,), jnp.float32, -scale, scale)

    out = jax.block_until_ready(output_layer(enc, w, b))
    ref = _reference(enc, w, b)
    assert out.shape == (B, C)
    assert jnp.allclose(out, ref, atol=1e-5, rtol=1e-5), "toy f32 mismatch"

    # ---- Medium config: exercises batch tiling (2 parallel steps), the
    # squeezed-seq CLS gather, lane-dense C, and the bf16 operand path --------
    B, S, D, C = 64, 8, 1024, 256
    k0, k1, k2, key = jax.random.split(key, 4)
    enc = jax.random.normal(k0, (B, S, D), dtype=jnp.float32)
    scale = 1.0 / (D ** 0.5)
    w = jax.random.uniform(k1, (D, C), jnp.float32, -scale, scale)
    b = jax.random.uniform(k2, (C,), jnp.float32, -scale, scale)
    ref = _reference(enc, w, b)

    out_f32 = jax.block_until_ready(output_layer(enc, w, b))
    assert out_f32.shape == (B, C)
    assert jnp.allclose(out_f32, ref, atol=2e-2, rtol=2e-2), "medium f32 mismatch"

    out_bf16 = jax.block_until_ready(
        output_layer(enc, w, b, matmul_dtype=jnp.bfloat16))
    assert out_bf16.shape == (B, C)
    assert jnp.allclose(out_bf16, ref, atol=5e-2, rtol=5e-2), "medium bf16 mismatch"

    print("KERNEL_OK")
</pallas_src>

<mosaic_0001>
module attributes {stable_mosaic.version = 11 : i64} {
  func.func @_output_layer_kernel(%arg0: i32, %arg1: i32, %arg2: memref<8x32xf32, #tpu.memory_space<vmem>>, %arg3: memref<32x128xf32, #tpu.memory_space<vmem>>, %arg4: memref<1x128xf32, #tpu.memory_space<vmem>>, %arg5: memref<8x128xf32, #tpu.memory_space<vmem>>) attributes {dimension_semantics = [#tpu.dimension_semantics<parallel>, #tpu.dimension_semantics<parallel>], iteration_bounds = array<i64: 1, 1>, scalar_prefetch = 0 : i64, scratch_operands = 0 : i64, tpu.core_type = #tpu.core_type<tc>, window_params = [{transform_indices = @transform_0, window_bounds = array<i64: 8, 32>}, {transform_indices = @transform_1, window_bounds = array<i64: 32, 128>}, {transform_indices = @transform_2, window_bounds = array<i64: 1, 128>}, {transform_indices = @transform_3, window_bounds = array<i64: 8, 128>}]} {
    %c0 = arith.constant 0 : index
    %c0_0 = arith.constant 0 : index
    %0 = vector.load %arg2[%c0, %c0_0] : memref<8x32xf32, #tpu.memory_space<vmem>>, vector<8x32xf32>
    %c0_1 = arith.constant 0 : index
    %c0_2 = arith.constant 0 : index
    %1 = vector.load %arg3[%c0_1, %c0_2] : memref<32x128xf32, #tpu.memory_space<vmem>>, vector<32x128xf32>
    %cst = arith.constant dense<0.000000e+00> : vector<8x128xf32>
    %2 = tpu.matmul %0, %1, %cst {dimension_numbers = #tpu.dot_dimension_numbers<[1], [0], [0], [1], [0, 0, 1, 1], [], []>} : vector<8x32xf32>, vector<32x128xf32>, vector<8x128xf32> -> vector<8x128xf32>
    %c0_3 = arith.constant 0 : index
    %c0_4 = arith.constant 0 : index
    %3 = vector.load %arg4[%c0_3, %c0_4] : memref<1x128xf32, #tpu.memory_space<vmem>>, vector<1x128xf32>
    %4 = vector.broadcast %3 : vector<1x128xf32> to vector<8x128xf32>
    %5 = arith.addf %2, %4 : vector<8x128xf32>
    %c0_5 = arith.constant 0 : index
    %c0_6 = arith.constant 0 : index
    %6 = vector.load %arg5[%c0_5, %c0_6] : memref<8x128xf32, #tpu.memory_space<vmem>>, vector<8x128xf32>
    tpu.vector_store %arg5[%c0_5, %c0_6], %5 {strides = array<i32>} : memref<8x128xf32, #tpu.memory_space<vmem>>, vector<8x128xf32>,
    return
  }
  func.func @transform_0(%arg0: i32, %arg1: i32) -> (i32, i32) {
    %c0_i32 = arith.constant 0 : i32
    %c0_i32_0 = arith.constant 0 : i32
    return %arg0, %c0_i32 : i32, i32
  }
  func.func @transform_1(%arg0: i32, %arg1: i32) -> (i32, i32) {
    %c0_i32 = arith.constant 0 : i32
    %c0_i32_0 = arith.constant 0 : i32
    return %c0_i32, %arg1 : i32, i32
  }
  func.func @transform_2(%arg0: i32, %arg1: i32) -> (i32, i32) {
    %c0_i32 = arith.constant 0 : i32
    %c0_i32_0 = arith.constant 0 : i32
    return %c0_i32, %arg1 : i32, i32
  }
  func.func @transform_3(%arg0: i32, %arg1: i32) -> (i32, i32) {
    %c0_i32 = arith.constant 0 : i32
    return %arg0, %arg1 : i32, i32
  }
}

</mosaic_0001>

<llo_original>
// kernel: tpu_custom_call.1
$region0: #{tpu_custom_call.1}
  #allocation0 [shape = 'u32[]', space=smem, size = 0x4, offset = 0x4, fixed_abs, tag = 'smem constant byte address 0x4 - core index']
  #allocation1 [shape = 'u32[72,128]{1,0:T(1,128)}', space=vmem, size = 0x9000, scoped, tag = 'internal scratch']
  %s0 = inlined_call_operand.hbm [shape: f32[2,32], index: 0, kind: input, shape index: {}]
  %s1 = inlined_call_operand.hbm [shape: f32[32,128], index: 1, kind: input, shape index: {}]
  %s2 = inlined_call_operand.vmem [shape: f32[1,128], index: 2, kind: input, shape index: {}]
  %s3 = inlined_call_operand.hbm [shape: f32[2,128], index: 3, kind: output, shape index: {}]
  %s4 = sld [smem:[#allocation0]]
  $region30: #{tpu_custom_call.1} parent=0
    _
  %s6 = ssub.s32 1, %s4
  %s7 = scalar_select 0, %s6, %s4
  $region1: #{tpu_custom_call.1} parent=0
    #allocation2 [shape = 'u8[4096]{0}', space=vmem, size = 0x1000, scoped, tag = 'input window, operand 0, single buffered']
    #allocation3 [shape = 's32[1]{0}', space=sflag, size = 0x4, scoped, tag = 'scoped memory for tpu_custom_call.1']
    #allocation4 [shape = 's32[1]{0}', space=sflag, size = 0x4, scoped, tag = 'scoped memory for tpu_custom_call.1']
    #allocation5 [shape = 'u8[16384]{0}', space=vmem, size = 0x4000, scoped, tag = 'input window, operand 1, single buffered']
    #allocation6 [shape = 's32[1]{0}', space=sflag, size = 0x4, scoped, tag = 'scoped memory for tpu_custom_call.1']
    #allocation7 [shape = 'u8[4096]{0}', space=vmem, size = 0x1000, scoped, tag = 'output window, operand 0, single buffered']
    %8 = vsyncpa [#allocation3], 0
    %9 = vsyncpa [#allocation6], 0
    %10 = vsyncpa [#allocation4], 0
    // Predicated region
    $region2: #{tpu_custom_call.1} parent=1 // pred_check
      _
    $region3: #{tpu_custom_call.1} parent=1 // pred_check_branch
      %12 = sbr.rel (0) target = $region5
    $region4: #{tpu_custom_call.1} parent=1 // pred_region
      %14 = vsyncadd [#allocation3], 96
      %s15 = sshll.u32 %s0, 4
      %s16 = int_to_ptr.hbm [resolvable:$true] %s15
      %s17 = sshll.u32 [#allocation2], 4
      %s18 = int_to_ptr.vmem [resolvable:$true] %s17
      %23 = dma.hbm_to_vmem [thread:$0]  %s16, 32, %s18, [#allocation3], 32, 32, 2
    $region5: #{tpu_custom_call.1} parent=1 // pred_fallthru
      _
    // Predicated region
    $region6: #{tpu_custom_call.1} parent=1 // pred_check
      _
    $region7: #{tpu_custom_call.1} parent=1 // pred_check_branch
      %25 = sbr.rel (0) target = $region9
    $region8: #{tpu_custom_call.1} parent=1 // pred_region
      %27 = vsyncadd [#allocation6], 0
      %s28 = sshll.u32 %s1, 4
      %s29 = int_to_ptr.hbm [resolvable:$true] %s28
      %s30 = sshll.u32 [#allocation5], 4
      %s31 = int_to_ptr.vmem [resolvable:$true] %s30
      %36 = dma.hbm_to_vmem [thread:$0]  %s29, 512, %s31, [#allocation6], 128, 128, 8
    $region9: #{tpu_custom_call.1} parent=1 // pred_fallthru
      _
    // Predicated region
    $region10: #{tpu_custom_call.1} parent=1 // pred_check
      _
    $region11: #{tpu_custom_call.1} parent=1 // pred_check_branch
      %38 = sbr.rel (0) target = $region13
    $region12: #{tpu_custom_call.1} parent=1 // pred_region
      _
    $region13: #{tpu_custom_call.1} parent=1 // pred_fallthru
      _
    // Predicated region
    $region14: #{tpu_custom_call.1} parent=1 // pred_check
      _
    $region15: #{tpu_custom_call.1} parent=1 // pred_check_branch
      %40 = sbr.rel (0) target = $region17
    $region16: #{tpu_custom_call.1} parent=1 // pred_region
      %42 = dma.done [#allocation3], 128
    $region17: #{tpu_custom_call.1} parent=1 // pred_fallthru
      _
    // Predicated region
    $region18: #{tpu_custom_call.1} parent=1 // pred_check
      _
    $region19: #{tpu_custom_call.1} parent=1 // pred_check_branch
      %44 = sbr.rel (0) target = $region21
    $region20: #{tpu_custom_call.1} parent=1 // pred_region
      %46 = dma.done [#allocation6], 512
    $region21: #{tpu_custom_call.1} parent=1 // pred_fallthru
      _
    %v47 = vld [vmem:[#allocation2] sm:$0xff]
    %v48 = vld [vmem:[#allocation5] sm:$0xff]
    %v49 = vld [vmem:[#allocation5 + $0x8] sm:$0xff]
    %v50 = vld [vmem:[#allocation5 + $0x10] sm:$0xff]
    %v51 = vld [vmem:[#allocation5 + $0x18] sm:$0xff]
    %v52 = vld [vmem:[%s2] sm:$0x1]
    %v54 = vperm.slane %v52, 0
    %vm56 = vcmask 261120
    %v58 = vsel %vm56, %v47, 0
    %60 = vmatpush.msra.mxu0 0.0
    %61 = vmatpush.msra.mxu0 0.0
    %62 = vmatpush.msra.mxu0 0.0
    %63 = vmatpush.msra.mxu0 0.0
    %64 = vmatpush.msra.mxu0 0.0
    %65 = vmatpush.msra.mxu0 0.0
    %66 = vmatpush.msra.mxu0 0.0
    %67 = vmatpush.msra.mxu0 0.0
    %68 = vmatpush.msra.mxu0 0.0
    %69 = vmatpush.msra.mxu0 0.0
    %70 = vmatpush.msra.mxu0 0.0
    %71 = vmatpush.msra.mxu0 0.0
    %72 = vmatpush.msra.mxu0 %v51
    %73 = vmatpush.msra.mxu0 %v50
    %74 = vmatpush.msra.mxu0 %v49
    %75 = vmatpush.msra.mxu0 %v48
    %76 = vmatmul.f32.gmra.mxu0 %v58
    %v77 = vpop.f32.mrf.mxu0
    %v78 = vadd.f32 %v54, %v77
    %79 = vdwg.mxu0
    %80 = vst [vmem:[#allocation7] sm:$0xff] %v78
    // Predicated region
    $region22: #{tpu_custom_call.1} parent=1 // pred_check
      _
    $region23: #{tpu_custom_call.1} parent=1 // pred_check_branch
      %82 = sbr.rel (0) target = $region25
    $region24: #{tpu_custom_call.1} parent=1 // pred_region
      %84 = vsyncadd [#allocation4], 96
      %s85 = sshll.u32 [#allocation7], 4
      %s86 = int_to_ptr.vmem [resolvable:$true] %s85
      %s87 = sshll.u32 %s3, 4
      %s88 = int_to_ptr.hbm [resolvable:$true] %s87
      %93 = dma.vmem_to_hbm [thread:$0]  %s86, 32, %s88, [#allocation4], 32, 32, 2
    $region25: #{tpu_custom_call.1} parent=1 // pred_fallthru
      _
    // Predicated region
    $region26: #{tpu_custom_call.1} parent=1 // pred_check
      _
    $region27: #{tpu_custom_call.1} parent=1 // pred_check_branch
      %95 = sbr.rel (0) target = $region29
    $region28: #{tpu_custom_call.1} parent=1 // pred_region
      %97 = dma.done [#allocation4], 128
    $region29: #{tpu_custom_call.1} parent=1 // pred_fallthru
      _
    %98 = vsyncpa [#allocation3], 1
    %99 = vsyncpa [#allocation6], 1
    %100 = vsyncpa [#allocation4], 1

</llo_original>
